<compile_context>
chip_gen: v7x
topology: tpu7x:2x2x1
jax: 0.10.0
libtpu: 0.0.40
codegen_flags: <defaults>
</compile_context>

<pallas_src>
import math
from functools import partial

import jax
import jax.numpy as jnp
from jax.experimental import pallas as pl
from jax.experimental.pallas import tpu as pltpu  # noqa: F401  (TPU backend)

LANE = 128     # vreg lane width   -> channel padding target (lane-dense stores)
SUBLANE = 8    # vreg sublane count -> row padding target


def _round_up(x, m):
    return ((x + m - 1) // m) * m


def _fused_scn2_kernel(n_layers,
                       l0_ref, l1_ref, l2_ref,
                       x0_ref, x1_ref, x2_ref,
                       w0_ref, w1_ref, w2_ref,
                       o0_ref, o1_ref, o2_ref):
    """Fused SCN2 forward: for each layer, x_r <- relu(L_r @ (x_r @ W_r[layer])).

    All operands are single full-array VMEM blocks; intermediates live in vregs/VMEM
    and never touch HBM. Two MXU matmuls + one VPU relu per (layer, rank).
    """
    l0 = l0_ref[...]
    l1 = l1_ref[...]
    l2 = l2_ref[...]
    x0 = x0_ref[...]
    x1 = x1_ref[...]
    x2 = x2_ref[...]

    def conv_relu(lap, x, w):
        xw = jnp.dot(x, w, preferred_element_type=jnp.float32)
        y = jnp.dot(lap, xw, preferred_element_type=jnp.float32)
        return jnp.maximum(y, 0.0)

    # n_layers is a trace-time constant -> static unrolled loop (LLO sees everything).
    for layer in range(n_layers):
        x0 = conv_relu(l0, x0, w0_ref[layer])
        x1 = conv_relu(l1, x1, w1_ref[layer])
        x2 = conv_relu(l2, x2, w2_ref[layer])

    o0_ref[...] = x0.astype(o0_ref.dtype)
    o1_ref[...] = x1.astype(o1_ref.dtype)
    o2_ref[...] = x2.astype(o2_ref.dtype)


def _full_spec(shape):
    # Full-array block (block_shape == array shape satisfies the (8,128) rule).
    return pl.BlockSpec(shape, lambda: (0,) * len(shape))


def _fused_scn2_call(l0p, l1p, l2p, x0p, x1p, x2p, w0p, w1p, w2p):
    n_layers = w0p.shape[0]
    n0, n1, n2 = l0p.shape[0], l1p.shape[0], l2p.shape[0]
    out_shapes = (
        jax.ShapeDtypeStruct((n0, LANE), jnp.float32),
        jax.ShapeDtypeStruct((n1, LANE), jnp.float32),
        jax.ShapeDtypeStruct((n2, LANE), jnp.float32),
    )
    return pl.pallas_call(
        partial(_fused_scn2_kernel, n_layers),
        out_shape=out_shapes,
        in_specs=[
            _full_spec(l0p.shape), _full_spec(l1p.shape), _full_spec(l2p.shape),
            _full_spec(x0p.shape), _full_spec(x1p.shape), _full_spec(x2p.shape),
            _full_spec(w0p.shape), _full_spec(w1p.shape), _full_spec(w2p.shape),
        ],
        out_specs=(
            _full_spec((n0, LANE)),
            _full_spec((n1, LANE)),
            _full_spec((n2, LANE)),
        ),
    )(l0p, l1p, l2p, x0p, x1p, x2p, w0p, w1p, w2p)


def _pad2d(a, rows, cols):
    return jnp.pad(a, ((0, rows - a.shape[0]), (0, cols - a.shape[1])))


def _pad_weights(w, dim):
    # w: (n_layers, c, c) -> (n_layers, dim, dim), zero padded.
    return jnp.pad(w, ((0, 0), (0, dim - w.shape[1]), (0, dim - w.shape[2])))


@jax.jit
def scn2_forward(params, x_0, x_1, x_2, laplacian_0, laplacian_1, laplacian_2):
    """SCN2.forward: stack of SCN2Layer, each layer = per-rank relu(L @ X @ W).

    Pads channels to 128 lanes / rows to a multiple of 8, runs one fused Pallas
    kernel over all layers and ranks, then slices back to the original shapes.
    """
    n0, c0 = x_0.shape
    n1, c1 = x_1.shape
    n2, c2 = x_2.shape
    n0p = _round_up(n0, SUBLANE)
    n1p = _round_up(n1, SUBLANE)
    n2p = _round_up(n2, SUBLANE)

    x0p = _pad2d(x_0.astype(jnp.float32), n0p, LANE)
    x1p = _pad2d(x_1.astype(jnp.float32), n1p, LANE)
    x2p = _pad2d(x_2.astype(jnp.float32), n2p, LANE)
    l0p = _pad2d(laplacian_0.astype(jnp.float32), n0p, n0p)
    l1p = _pad2d(laplacian_1.astype(jnp.float32), n1p, n1p)
    l2p = _pad2d(laplacian_2.astype(jnp.float32), n2p, n2p)
    w0p = _pad_weights(params["w0"], LANE)
    w1p = _pad_weights(params["w1"], LANE)
    w2p = _pad_weights(params["w2"], LANE)

    o0, o1, o2 = _fused_scn2_call(l0p, l1p, l2p, x0p, x1p, x2p, w0p, w1p, w2p)
    return o0[:n0, :c0], o1[:n1, :c1], o2[:n2, :c2]


def xavier_uniform(key, fan_in, fan_out, gain=1.414):
    """Matches torch.nn.init.xavier_uniform_ (gain=1.414 as in topomodelx Conv)."""
    bound = gain * math.sqrt(6.0 / (fan_in + fan_out))
    return jax.random.uniform(
        key, (fan_in, fan_out), minval=-bound, maxval=bound, dtype=jnp.float32
    )


def init_scn2_params(key, in_channels_0, in_channels_1, in_channels_2, n_layers=2):
    """Deterministic synthetic weights, stacked per rank across layers."""
    w0, w1, w2 = [], [], []
    for _ in range(n_layers):
        k0, k1, k2, key = jax.random.split(key, 4)
        w0.append(xavier_uniform(k0, in_channels_0, in_channels_0))
        w1.append(xavier_uniform(k1, in_channels_1, in_channels_1))
        w2.append(xavier_uniform(k2, in_channels_2, in_channels_2))
    return {
        "w0": jnp.stack(w0),   # (n_layers, c0, c0)
        "w1": jnp.stack(w1),   # (n_layers, c1, c1)
        "w2": jnp.stack(w2),   # (n_layers, c2, c2)
    }


def _reference_forward(params, x_0, x_1, x_2, l_0, l_1, l_2):
    """Pure-JAX reference for sanity check (unpadded)."""
    n_layers = params["w0"].shape[0]
    for layer in range(n_layers):
        x_0 = jax.nn.relu(l_0 @ (x_0 @ params["w0"][layer]))
        x_1 = jax.nn.relu(l_1 @ (x_1 @ params["w1"][layer]))
        x_2 = jax.nn.relu(l_2 @ (x_2 @ params["w2"][layer]))
    return x_0, x_1, x_2


if __name__ == "__main__":
    key = jax.random.PRNGKey(0)

    # Small simplicial complex: 16 nodes, 32 edges, 8 faces.
    n_nodes, n_edges, n_faces = 16, 32, 8
    c0, c1, c2 = 4, 6, 8
    n_layers = 2

    keys = jax.random.split(key, 8)
    x_0 = jax.random.normal(keys[0], (n_nodes, c0), dtype=jnp.float32)
    x_1 = jax.random.normal(keys[1], (n_edges, c1), dtype=jnp.float32)
    x_2 = jax.random.normal(keys[2], (n_faces, c2), dtype=jnp.float32)

    def make_laplacian(k, n):
        a = jax.random.normal(k, (n, n), dtype=jnp.float32) * 0.1
        return (a + a.T) * 0.5  # symmetric, dense stand-in for the Hodge Laplacian

    laplacian_0 = make_laplacian(keys[3], n_nodes)
    laplacian_1 = make_laplacian(keys[4], n_edges)
    laplacian_2 = make_laplacian(keys[5], n_faces)

    params = init_scn2_params(keys[6], c0, c1, c2, n_layers=n_layers)

    out_0, out_1, out_2 = scn2_forward(
        params, x_0, x_1, x_2, laplacian_0, laplacian_1, laplacian_2
    )
    jax.block_until_ready((out_0, out_1, out_2))

    # Correctness check against plain-JAX reference.
    ref_0, ref_1, ref_2 = _reference_forward(
        params, x_0, x_1, x_2, laplacian_0, laplacian_1, laplacian_2
    )
    assert out_0.shape == (n_nodes, c0)
    assert out_1.shape == (n_edges, c1)
    assert out_2.shape == (n_faces, c2)
    assert jnp.allclose(out_0, ref_0, atol=1e-5, rtol=1e-5)
    assert jnp.allclose(out_1, ref_1, atol=1e-5, rtol=1e-5)
    assert jnp.allclose(out_2, ref_2, atol=1e-5, rtol=1e-5)

    print("KERNEL_OK")
</pallas_src>

<mosaic_0001>
module attributes {stable_mosaic.version = 11 : i64} {
  func.func @_fused_scn2_kernel(%arg0: memref<16x16xf32, #tpu.memory_space<vmem>>, %arg1: memref<32x32xf32, #tpu.memory_space<vmem>>, %arg2: memref<8x8xf32, #tpu.memory_space<vmem>>, %arg3: memref<16x128xf32, #tpu.memory_space<vmem>>, %arg4: memref<32x128xf32, #tpu.memory_space<vmem>>, %arg5: memref<8x128xf32, #tpu.memory_space<vmem>>, %arg6: memref<2x128x128xf32, #tpu.memory_space<vmem>>, %arg7: memref<2x128x128xf32, #tpu.memory_space<vmem>>, %arg8: memref<2x128x128xf32, #tpu.memory_space<vmem>>, %arg9: memref<16x128xf32, #tpu.memory_space<vmem>>, %arg10: memref<32x128xf32, #tpu.memory_space<vmem>>, %arg11: memref<8x128xf32, #tpu.memory_space<vmem>>) attributes {dimension_semantics = [], scalar_prefetch = 0 : i64, scratch_operands = 0 : i64, tpu.core_type = #tpu.core_type<tc>} {
    %c0 = arith.constant 0 : index
    %c0_0 = arith.constant 0 : index
    %0 = vector.load %arg0[%c0, %c0_0] : memref<16x16xf32, #tpu.memory_space<vmem>>, vector<16x16xf32>
    %c0_1 = arith.constant 0 : index
    %c0_2 = arith.constant 0 : index
    %1 = vector.load %arg1[%c0_1, %c0_2] : memref<32x32xf32, #tpu.memory_space<vmem>>, vector<32x32xf32>
    %c0_3 = arith.constant 0 : index
    %c0_4 = arith.constant 0 : index
    %2 = vector.load %arg2[%c0_3, %c0_4] : memref<8x8xf32, #tpu.memory_space<vmem>>, vector<8x8xf32>
    %c0_5 = arith.constant 0 : index
    %c0_6 = arith.constant 0 : index
    %3 = vector.load %arg3[%c0_5, %c0_6] : memref<16x128xf32, #tpu.memory_space<vmem>>, vector<16x128xf32>
    %c0_7 = arith.constant 0 : index
    %c0_8 = arith.constant 0 : index
    %4 = vector.load %arg4[%c0_7, %c0_8] : memref<32x128xf32, #tpu.memory_space<vmem>>, vector<32x128xf32>
    %c0_9 = arith.constant 0 : index
    %c0_10 = arith.constant 0 : index
    %5 = vector.load %arg5[%c0_9, %c0_10] : memref<8x128xf32, #tpu.memory_space<vmem>>, vector<8x128xf32>
    %c0_11 = arith.constant 0 : index
    %c0_12 = arith.constant 0 : index
    %c0_13 = arith.constant 0 : index
    %6 = vector.load %arg6[%c0_11, %c0_12, %c0_13] : memref<2x128x128xf32, #tpu.memory_space<vmem>>, vector<1x128x128xf32>
    %7 = vector.shape_cast %6 : vector<1x128x128xf32> to vector<128x128xf32>
    %cst = arith.constant dense<0.000000e+00> : vector<16x128xf32>
    %8 = tpu.matmul %3, %7, %cst {dimension_numbers = #tpu.dot_dimension_numbers<[1], [0], [0], [1], [0, 0, 1, 1], [], []>} : vector<16x128xf32>, vector<128x128xf32>, vector<16x128xf32> -> vector<16x128xf32>
    %cst_14 = arith.constant dense<0.000000e+00> : vector<16x128xf32>
    %9 = tpu.matmul %0, %8, %cst_14 {dimension_numbers = #tpu.dot_dimension_numbers<[1], [0], [0], [1], [0, 0, 1, 1], [], []>} : vector<16x16xf32>, vector<16x128xf32>, vector<16x128xf32> -> vector<16x128xf32>
    %cst_15 = arith.constant 0.000000e+00 : f32
    %10 = vector.broadcast %cst_15 : f32 to vector<16x128xf32>
    %11 = arith.maximumf %9, %10 : vector<16x128xf32>
    %c0_16 = arith.constant 0 : index
    %c0_17 = arith.constant 0 : index
    %c0_18 = arith.constant 0 : index
    %12 = vector.load %arg7[%c0_16, %c0_17, %c0_18] : memref<2x128x128xf32, #tpu.memory_space<vmem>>, vector<1x128x128xf32>
    %13 = vector.shape_cast %12 : vector<1x128x128xf32> to vector<128x128xf32>
    %cst_19 = arith.constant dense<0.000000e+00> : vector<32x128xf32>
    %14 = tpu.matmul %4, %13, %cst_19 {dimension_numbers = #tpu.dot_dimension_numbers<[1], [0], [0], [1], [0, 0, 1, 1], [], []>} : vector<32x128xf32>, vector<128x128xf32>, vector<32x128xf32> -> vector<32x128xf32>
    %cst_20 = arith.constant dense<0.000000e+00> : vector<32x128xf32>
    %15 = tpu.matmul %1, %14, %cst_20 {dimension_numbers = #tpu.dot_dimension_numbers<[1], [0], [0], [1], [0, 0, 1, 1], [], []>} : vector<32x32xf32>, vector<32x128xf32>, vector<32x128xf32> -> vector<32x128xf32>
    %cst_21 = arith.constant 0.000000e+00 : f32
    %16 = vector.broadcast %cst_21 : f32 to vector<32x128xf32>
    %17 = arith.maximumf %15, %16 : vector<32x128xf32>
    %c0_22 = arith.constant 0 : index
    %c0_23 = arith.constant 0 : index
    %c0_24 = arith.constant 0 : index
    %18 = vector.load %arg8[%c0_22, %c0_23, %c0_24] : memref<2x128x128xf32, #tpu.memory_space<vmem>>, vector<1x128x128xf32>
    %19 = vector.shape_cast %18 : vector<1x128x128xf32> to vector<128x128xf32>
    %cst_25 = arith.constant dense<0.000000e+00> : vector<8x128xf32>
    %20 = tpu.matmul %5, %19, %cst_25 {dimension_numbers = #tpu.dot_dimension_numbers<[1], [0], [0], [1], [0, 0, 1, 1], [], []>} : vector<8x128xf32>, vector<128x128xf32>, vector<8x128xf32> -> vector<8x128xf32>
    %cst_26 = arith.constant dense<0.000000e+00> : vector<8x128xf32>
    %21 = tpu.matmul %2, %20, %cst_26 {dimension_numbers = #tpu.dot_dimension_numbers<[1], [0], [0], [1], [0, 0, 1, 1], [], []>} : vector<8x8xf32>, vector<8x128xf32>, vector<8x128xf32> -> vector<8x128xf32>
    %cst_27 = arith.constant 0.000000e+00 : f32
    %22 = vector.broadcast %cst_27 : f32 to vector<8x128xf32>
    %23 = arith.maximumf %21, %22 : vector<8x128xf32>
    %c1 = arith.constant 1 : index
    %c0_28 = arith.constant 0 : index
    %c0_29 = arith.constant 0 : index
    %24 = vector.load %arg6[%c1, %c0_28, %c0_29] : memref<2x128x128xf32, #tpu.memory_space<vmem>>, vector<1x128x128xf32>
    %25 = vector.shape_cast %24 : vector<1x128x128xf32> to vector<128x128xf32>
    %cst_30 = arith.constant dense<0.000000e+00> : vector<16x128xf32>
    %26 = tpu.matmul %11, %25, %cst_30 {dimension_numbers = #tpu.dot_dimension_numbers<[1], [0], [0], [1], [0, 0, 1, 1], [], []>} : vector<16x128xf32>, vector<128x128xf32>, vector<16x128xf32> -> vector<16x128xf32>
    %cst_31 = arith.constant dense<0.000000e+00> : vector<16x128xf32>
    %27 = tpu.matmul %0, %26, %cst_31 {dimension_numbers = #tpu.dot_dimension_numbers<[1], [0], [0], [1], [0, 0, 1, 1], [], []>} : vector<16x16xf32>, vector<16x128xf32>, vector<16x128xf32> -> vector<16x128xf32>
    %cst_32 = arith.constant 0.000000e+00 : f32
    %28 = vector.broadcast %cst_32 : f32 to vector<16x128xf32>
    %29 = arith.maximumf %27, %28 : vector<16x128xf32>
    %c1_33 = arith.constant 1 : index
    %c0_34 = arith.constant 0 : index
    %c0_35 = arith.constant 0 : index
    %30 = vector.load %arg7[%c1_33, %c0_34, %c0_35] : memref<2x128x128xf32, #tpu.memory_space<vmem>>, vector<1x128x128xf32>
    %31 = vector.shape_cast %30 : vector<1x128x128xf32> to vector<128x128xf32>
    %cst_36 = arith.constant dense<0.000000e+00> : vector<32x128xf32>
    %32 = tpu.matmul %17, %31, %cst_36 {dimension_numbers = #tpu.dot_dimension_numbers<[1], [0], [0], [1], [0, 0, 1, 1], [], []>} : vector<32x128xf32>, vector<128x128xf32>, vector<32x128xf32> -> vector<32x128xf32>
    %cst_37 = arith.constant dense<0.000000e+00> : vector<32x128xf32>
    %33 = tpu.matmul %1, %32, %cst_37 {dimension_numbers = #tpu.dot_dimension_numbers<[1], [0], [0], [1], [0, 0, 1, 1], [], []>} : vector<32x32xf32>, vector<32x128xf32>, vector<32x128xf32> -> vector<32x128xf32>
    %cst_38 = arith.constant 0.000000e+00 : f32
    %34 = vector.broadcast %cst_38 : f32 to vector<32x128xf32>
    %35 = arith.maximumf %33, %34 : vector<32x128xf32>
    %c1_39 = arith.constant 1 : index
    %c0_40 = arith.constant 0 : index
    %c0_41 = arith.constant 0 : index
    %36 = vector.load %arg8[%c1_39, %c0_40, %c0_41] : memref<2x128x128xf32, #tpu.memory_space<vmem>>, vector<1x128x128xf32>
    %37 = vector.shape_cast %36 : vector<1x128x128xf32> to vector<128x128xf32>
    %cst_42 = arith.constant dense<0.000000e+00> : vector<8x128xf32>
    %38 = tpu.matmul %23, %37, %cst_42 {dimension_numbers = #tpu.dot_dimension_numbers<[1], [0], [0], [1], [0, 0, 1, 1], [], []>} : vector<8x128xf32>, vector<128x128xf32>, vector<8x128xf32> -> vector<8x128xf32>
    %cst_43 = arith.constant dense<0.000000e+00> : vector<8x128xf32>
    %39 = tpu.matmul %2, %38, %cst_43 {dimension_numbers = #tpu.dot_dimension_numbers<[1], [0], [0], [1], [0, 0, 1, 1], [], []>} : vector<8x8xf32>, vector<8x128xf32>, vector<8x128xf32> -> vector<8x128xf32>
    %cst_44 = arith.constant 0.000000e+00 : f32
    %40 = vector.broadcast %cst_44 : f32 to vector<8x128xf32>
    %41 = arith.maximumf %39, %40 : vector<8x128xf32>
    %c0_45 = arith.constant 0 : index
    %c0_46 = arith.constant 0 : index
    %42 = vector.load %arg9[%c0_45, %c0_46] : memref<16x128xf32, #tpu.memory_space<vmem>>, vector<16x128xf32>
    tpu.vector_store %arg9[%c0_45, %c0_46], %29 {strides = array<i32>} : memref<16x128xf32, #tpu.memory_space<vmem>>, vector<16x128xf32>,
    %c0_47 = arith.constant 0 : index
    %c0_48 = arith.constant 0 : index
    %43 = vector.load %arg10[%c0_47, %c0_48] : memref<32x128xf32, #tpu.memory_space<vmem>>, vector<32x128xf32>
    tpu.vector_store %arg10[%c0_47, %c0_48], %35 {strides = array<i32>} : memref<32x128xf32, #tpu.memory_space<vmem>>, vector<32x128xf32>,
    %c0_49 = arith.constant 0 : index
    %c0_50 = arith.constant 0 : index
    %44 = vector.load %arg11[%c0_49, %c0_50] : memref<8x128xf32, #tpu.memory_space<vmem>>, vector<8x128xf32>
    tpu.vector_store %arg11[%c0_49, %c0_50], %41 {strides = array<i32>} : memref<8x128xf32, #tpu.memory_space<vmem>>, vector<8x128xf32>,
    return
  }
}

</mosaic_0001>

<llo_original>
// kernel: scn2_forward.1
$region0: #{scn2_forward.1}
  #allocation0 [shape = 'u32[]', space=smem, size = 0x4, offset = 0x4, fixed_abs, tag = 'smem constant byte address 0x4 - core index']
  #allocation1 [shape = 'u32[144,128]{1,0:T(1,128)}', space=vmem, size = 0x12000, scoped, tag = 'internal scratch']
  %s0 = inlined_call_operand.vmem [shape: f32[16,16], index: 0, kind: input, shape index: {}]
  %s1 = inlined_call_operand.vmem [shape: f32[32,32], index: 1, kind: input, shape index: {}]
  %s2 = inlined_call_operand.vmem [shape: f32[8,8], index: 2, kind: input, shape index: {}]
  %s3 = inlined_call_operand.vmem [shape: f32[16,128], index: 3, kind: input, shape index: {}]
  %s4 = inlined_call_operand.vmem [shape: f32[32,128], index: 4, kind: input, shape index: {}]
  %s5 = inlined_call_operand.vmem [shape: f32[8,128], index: 5, kind: input, shape index: {}]
  %s6 = inlined_call_operand.vmem [shape: f32[2,128,128], index: 6, kind: input, shape index: {}]
  %s7 = inlined_call_operand.vmem [shape: f32[2,128,128], index: 7, kind: input, shape index: {}]
  %s8 = inlined_call_operand.vmem [shape: f32[2,128,128], index: 8, kind: input, shape index: {}]
  %s9 = inlined_call_operand.vmem [shape: f32[16,128], index: 9, kind: output, shape index: {0}]
  %s10 = inlined_call_operand.vmem [shape: f32[32,128], index: 10, kind: output, shape index: {1}]
  %s11 = inlined_call_operand.hbm [shape: f32[8,128], index: 11, kind: output, shape index: {2}]
  %12 = xla_tuple %s9, %s10, %s11
  %s13 = sld [smem:[#allocation0]]
  $region62: #{scn2_forward.1} parent=0
    _
  %s15 = ssub.s32 1, %s13
  %s16 = scalar_select 0, %s15, %s13
  $region1: #{scn2_forward.1} parent=0
    #allocation2 [shape = 'u8[4096]{0}', space=vmem, size = 0x1000, scoped, tag = 'output window, operand 2, single buffered']
    #allocation3 [shape = 's32[1]{0}', space=sflag, size = 0x4, scoped, tag = 'scoped memory for scn2_forward.1']
    %17 = vsyncpa [#allocation3], 0
    // Predicated region
    $region2: #{scn2_forward.1} parent=1 // pred_check
      _
    $region3: #{scn2_forward.1} parent=1 // pred_check_branch
      %19 = sbr.rel (0) target = $region5
    $region4: #{scn2_forward.1} parent=1 // pred_region
      _
    $region5: #{scn2_forward.1} parent=1 // pred_fallthru
      _
    // Predicated region
    $region6: #{scn2_forward.1} parent=1 // pred_check
      _
    $region7: #{scn2_forward.1} parent=1 // pred_check_branch
      %21 = sbr.rel (0) target = $region9
    $region8: #{scn2_forward.1} parent=1 // pred_region
      _
    $region9: #{scn2_forward.1} parent=1 // pred_fallthru
      _
    // Predicated region
    $region10: #{scn2_forward.1} parent=1 // pred_check
      _
    $region11: #{scn2_forward.1} parent=1 // pred_check_branch
      %23 = sbr.rel (0) target = $region13
    $region12: #{scn2_forward.1} parent=1 // pred_region
      _
    $region13: #{scn2_forward.1} parent=1 // pred_fallthru
      _
    // Predicated region
    $region14: #{scn2_forward.1} parent=1 // pred_check
      _
    $region15: #{scn2_forward.1} parent=1 // pred_check_branch
      %25 = sbr.rel (0) target = $region17
    $region16: #{scn2_forward.1} parent=1 // pred_region
      _
    $region17: #{scn2_forward.1} parent=1 // pred_fallthru
      _
    // Predicated region
    $region18: #{scn2_forward.1} parent=1 // pred_check
      _
    $region19: #{scn2_forward.1} parent=1 // pred_check_branch
      %27 = sbr.rel (0) target = $region21
    $region20: #{scn2_forward.1} parent=1 // pred_region
      _
    $region21: #{scn2_forward.1} parent=1 // pred_fallthru
      _
    // Predicated region
    $region22: #{scn2_forward.1} parent=1 // pred_check
      _
    $region23: #{scn2_forward.1} parent=1 // pred_check_branch
      %29 = sbr.rel (0) target = $region25
    $region24: #{scn2_forward.1} parent=1 // pred_region
      _
    $region25: #{scn2_forward.1} parent=1 // pred_fallthru
      _
    // Predicated region
    $region26: #{scn2_forward.1} parent=1 // pred_check
      _
    $region27: #{scn2_forward.1} parent=1 // pred_check_branch
      %31 = sbr.rel (0) target = $region29
    $region28: #{scn2_forward.1} parent=1 // pred_region
      _
    $region29: #{scn2_forward.1} parent=1 // pred_fallthru
      _
    // Predicated region
    $region30: #{scn2_forward.1} parent=1 // pred_check
      _
    $region31: #{scn2_forward.1} parent=1 // pred_check_branch
      %33 = sbr.rel (0) target = $region33
    $region32: #{scn2_forward.1} parent=1 // pred_region
      _
    $region33: #{scn2_forward.1} parent=1 // pred_fallthru
      _
    // Predicated region
    $region34: #{scn2_forward.1} parent=1 // pred_check
      _
    $region35: #{scn2_forward.1} parent=1 // pred_check_branch
      %35 = sbr.rel (0) target = $region37
    $region36: #{scn2_forward.1} parent=1 // pred_region
      _
    $region37: #{scn2_forward.1} parent=1 // pred_fallthru
      _
    %v36 = vld [vmem:[%s0] sm:$0xff]
    %v37 = vld [vmem:[%s0 + $0x8] sm:$0xff]
    %v38 = vld [vmem:[%s1] sm:$0xff]
    %v39 = vld [vmem:[%s1 + $0x8] sm:$0xff]
    %v40 = vld [vmem:[%s1 + $0x10] sm:$0xff]
    %v41 = vld [vmem:[%s1 + $0x18] sm:$0xff]
    %v42 = vld [vmem:[%s2] sm:$0xff]
    %v43 = vld [vmem:[%s3] sm:$0xff]
    %v44 = vld [vmem:[%s3 + $0x8] sm:$0xff]
    %v45 = vld [vmem:[%s4] sm:$0xff]
    %v46 = vld [vmem:[%s4 + $0x8] sm:$0xff]
    %v47 = vld [vmem:[%s4 + $0x10] sm:$0xff]
    %v48 = vld [vmem:[%s4 + $0x18] sm:$0xff]
    %v49 = vld [vmem:[%s5] sm:$0xff]
    %v50 = vld [vmem:[%s6] sm:$0xff]
    %v51 = vld [vmem:[%s6 + $0x8] sm:$0xff]
    %v52 = vld [vmem:[%s6 + $0x10] sm:$0xff]
    %v53 = vld [vmem:[%s6 + $0x18] sm:$0xff]
    %v54 = vld [vmem:[%s6 + $0x20] sm:$0xff]
    %v55 = vld [vmem:[%s6 + $0x28] sm:$0xff]
    %v56 = vld [vmem:[%s6 + $0x30] sm:$0xff]
    %v57 = vld [vmem:[%s6 + $0x38] sm:$0xff]
    %v58 = vld [vmem:[%s6 + $0x40] sm:$0xff]
    %v59 = vld [vmem:[%s6 + $0x48] sm:$0xff]
    %v60 = vld [vmem:[%s6 + $0x50] sm:$0xff]
    %v61 = vld [vmem:[%s6 + $0x58] sm:$0xff]
    %v62 = vld [vmem:[%s6 + $0x60] sm:$0xff]
    %v63 = vld [vmem:[%s6 + $0x68] sm:$0xff]
    %v64 = vld [vmem:[%s6 + $0x70] sm:$0xff]
    %v65 = vld [vmem:[%s6 + $0x78] sm:$0xff]
    %66 = vmatprep.subr.mxu0 0.0
    %67 = vmatpush1.msra.mxu0 %v50
    %68 = vmatprep.subr.mxu0 0.0
    %69 = vmatpush1.msra.mxu0 %v51
    %70 = vmatprep.subr.mxu0 0.0
    %71 = vmatpush1.msra.mxu0 %v52
    %72 = vmatprep.subr.mxu0 0.0
    %73 = vmatpush1.msra.mxu0 %v53
    %74 = vmatprep.subr.mxu0 0.0
    %75 = vmatpush1.msra.mxu0 %v54
    %76 = vmatprep.subr.mxu0 0.0
    %77 = vmatpush1.msra.mxu0 %v55
    %78 = vmatprep.subr.mxu0 0.0
    %79 = vmatpush1.msra.mxu0 %v56
    %80 = vmatprep.subr.mxu0 0.0
    %81 = vmatpush1.msra.mxu0 %v57
    %82 = vmatprep.subr.mxu0 0.0
    %83 = vmatpush1.msra.mxu0 %v58
    %84 = vmatprep.subr.mxu0 0.0
    %85 = vmatpush1.msra.mxu0 %v59
    %86 = vmatprep.subr.mxu0 0.0
    %87 = vmatpush1.msra.mxu0 %v60
    %88 = vmatprep.subr.mxu0 0.0
    %89 = vmatpush1.msra.mxu0 %v61
    %90 = vmatprep.subr.mxu0 0.0
    %91 = vmatpush1.msra.mxu0 %v62
    %92 = vmatprep.subr.mxu0 0.0
    %93 = vmatpush1.msra.mxu0 %v63
    %94 = vmatprep.subr.mxu0 0.0
    %95 = vmatpush1.msra.mxu0 %v64
    %96 = vmatprep.subr.mxu0 0.0
    %97 = vmatpush1.msra.mxu0 %v65
    %98 = vmatprep.subr.mxu0 0.0
    %99 = vmatpush1.msra.mxu0 0.0
    %100 = vmatprep.subr.mxu0 0.0
    %101 = vmatpush1.msra.mxu0 0.0
    %102 = vmatprep.subr.mxu0 0.0
    %103 = vmatpush1.msra.mxu0 0.0
    %104 = vmatprep.subr.mxu0 0.0
    %105 = vmatpush1.msra.mxu0 0.0
    %106 = vmatprep.subr.mxu0 0.0
    %107 = vmatpush1.msra.mxu0 0.0
    %108 = vmatprep.subr.mxu0 0.0
    %109 = vmatpush1.msra.mxu0 0.0
    %110 = vmatprep.subr.mxu0 0.0
    %111 = vmatpush1.msra.mxu0 0.0
    %112 = vmatprep.subr.mxu0 0.0
    %113 = vmatpush1.msra.mxu0 0.0
    %114 = vmatprep.subr.mxu0 0.0
    %115 = vmatpush1.msra.mxu0 0.0
    %116 = vmatprep.subr.mxu0 0.0
    %117 = vmatpush1.msra.mxu0 0.0
    %118 = vmatprep.subr.mxu0 0.0
    %119 = vmatpush1.msra.mxu0 0.0
    %120 = vmatprep.subr.mxu0 0.0
    %121 = vmatpush1.msra.mxu0 0.0
    %122 = vmatprep.subr.mxu0 0.0
    %123 = vmatpush1.msra.mxu0 0.0
    %124 = vmatprep.subr.mxu0 0.0
    %125 = vmatpush1.msra.mxu0 0.0
    %126 = vmatprep.subr.mxu0 0.0
    %127 = vmatpush1.msra.mxu0 0.0
    %128 = vmatprep.subr.mxu0 0.0
    %129 = vmatpush1.msra.mxu0 0.0
    %130 = vmatprep.mubr.f32.mxu0 0.0
    %131 = vmatmul.mubr.f32.gmra.mrb[0].mxu0 %v43
    %v132 = vpop.f32.mrb[0].mxu0
    %v133 = vadd.f32 0.0, %v132
    %v134 = vpop.f32.mrb[0].mxu0
    %135 = vmatprep.mubr.f32.mxu0 0.0
    %136 = vmatmul.mubr.f32.gmra.mrb[0].mxu0 %v44
    %v137 = vpop.f32.mrb[0].mxu0
    %v138 = vadd.f32 0.0, %v137
    %v139 = vpop.f32.mrb[0].mxu0
    %140 = vdwg.mxu0
    %vm141 = vcmask 130048
    %v143 = vsel %vm141, %v36, 0
    %v146 = vsel %vm141, %v37, 0
    %148 = vmatprep.subr.mxu0 0.0
    %149 = vmatpush1.msra.mxu0 %v133
    %150 = vmatprep.subr.mxu0 0.0
    %151 = vmatpush1.msra.mxu0 %v138
    %152 = vmatprep.subr.mxu0 0.0
    %153 = vmatpush1.msra.mxu0 0.0
    %154 = vmatprep.subr.mxu0 0.0
    %155 = vmatpush1.msra.mxu0 0.0
    %156 = vmatprep.subr.mxu0 0.0
    %157 = vmatpush1.msra.mxu0 0.0
    %158 = vmatprep.subr.mxu0 0.0
    %159 = vmatpush1.msra.mxu0 0.0
    %160 = vmatprep.subr.mxu0 0.0
    %161 = vmatpush1.msra.mxu0 0.0
    %162 = vmatprep.subr.mxu0 0.0
    %163 = vmatpush1.msra.mxu0 0.0
    %164 = vmatprep.subr.mxu0 0.0
    %165 = vmatpush1.msra.mxu0 0.0
    %166 = vmatprep.subr.mxu0 0.0
    %167 = vmatpush1.msra.mxu0 0.0
    %168 = vmatprep.subr.mxu0 0.0
    %169 = vmatpush1.msra.mxu0 0.0
    %170 = vmatprep.subr.mxu0 0.0
    %171 = vmatpush1.msra.mxu0 0.0
    %172 = vmatprep.subr.mxu0 0.0
    %173 = vmatpush1.msra.mxu0 0.0
    %174 = vmatprep.subr.mxu0 0.0
    %175 = vmatpush1.msra.mxu0 0.0
    %176 = vmatprep.subr.mxu0 0.0
    %177 = vmatpush1.msra.mxu0 0.0
    %178 = vmatprep.subr.mxu0 0.0
    %179 = vmatpush1.msra.mxu0 0.0
    %180 = vmatprep.subr.mxu0 0.0
    %181 = vmatpush1.msra.mxu0 0.0
    %182 = vmatprep.subr.mxu0 0.0
    %183 = vmatpush1.msra.mxu0 0.0
    %184 = vmatprep.subr.mxu0 0.0
    %185 = vmatpush1.msra.mxu0 0.0
    %186 = vmatprep.subr.mxu0 0.0
    %187 = vmatpush1.msra.mxu0 0.0
    %188 = vmatprep.subr.mxu0 0.0
    %189 = vmatpush1.msra.mxu0 0.0
    %190 = vmatprep.subr.mxu0 0.0
    %191 = vmatpush1.msra.mxu0 0.0
    %192 = vmatprep.subr.mxu0 0.0
    %193 = vmatpush1.msra.mxu0 0.0
    %194 = vmatprep.subr.mxu0 0.0
    %195 = vmatpush1.msra.mxu0 0.0
    %196 = vmatprep.subr.mxu0 0.0
    %197 = vmatpush1.msra.mxu0 0.0
    %198 = vmatprep.subr.mxu0 0.0
    %199 = vmatpush1.msra.mxu0 0.0
    %200 = vmatprep.subr.mxu0 0.0
    %201 = vmatpush1.msra.mxu0 0.0
    %202 = vmatprep.subr.mxu0 0.0
    %203 = vmatpush1.msra.mxu0 0.0
    %204 = vmatprep.subr.mxu0 0.0
    %205 = vmatpush1.msra.mxu0 0.0
    %206 = vmatprep.subr.mxu0 0.0
    %207 = vmatpush1.msra.mxu0 0.0
    %208 = vmatprep.subr.mxu0 0.0
    %209 = vmatpush1.msra.mxu0 0.0
    %210 = vmatprep.subr.mxu0 0.0
    %211 = vmatpush1.msra.mxu0 0.0
    %212 = vmatprep.mubr.f32.mxu0 0.0
    %213 = vmatmul.mubr.f32.gmra.mrb[0].mxu0 %v143
    %v214 = vpop.f32.mrb[0].mxu0
    %v215 = vadd.f32 0.0, %v214
    %v216 = vpop.f32.mrb[0].mxu0
    %217 = vmatprep.mubr.f32.mxu0 0.0
    %218 = vmatmul.mubr.f32.gmra.mrb[0].mxu0 %v146
    %v219 = vpop.f32.mrb[0].mxu0
    %v220 = vadd.f32 0.0, %v219
    %v221 = vpop.f32.mrb[0].mxu0
    %222 = vdwg.mxu0
    %v223 = vmax.f32 %v215, 0.0
    %v224 = vmax.f32 %v220, 0.0
    %v225 = vld [vmem:[%s7] sm:$0xff]
    %v226 = vld [vmem:[%s7 + $0x8] sm:$0xff]
    %v227 = vld [vmem:[%s7 + $0x10] sm:$0xff]
    %v228 = vld [vmem:[%s7 + $0x18] sm:$0xff]
    %v229 = vld [vmem:[%s7 + $0x20] sm:$0xff]
    %v230 = vld [vmem:[%s7 + $0x28] sm:$0xff]
    %v231 = vld [vmem:[%s7 + $0x30] sm:$0xff]
    %v232 = vld [vmem:[%s7 + $0x38] sm:$0xff]
    %v233 = vld [vmem:[%s7 + $0x40] sm:$0xff]
    %v234 = vld [vmem:[%s7 + $0x48] sm:$0xff]
    %v235 = vld [vmem:[%s7 + $0x50] sm:$0xff]
    %v236 = vld [vmem:[%s7 + $0x58] sm:$0xff]
    %v237 = vld [vmem:[%s7 + $0x60] sm:$0xff]
    %v238 = vld [vmem:[%s7 + $0x68] sm:$0xff]
    %v239 = vld [vmem:[%s7 + $0x70] sm:$0xff]
    %v240 = vld [vmem:[%s7 + $0x78] sm:$0xff]
    %241 = vmatprep.subr.mxu0 0.0
    %242 = vmatpush1.msra.mxu0 %v225
    %243 = vmatprep.subr.mxu0 0.0
    %244 = vmatpush1.msra.mxu0 %v226
    %245 = vmatprep.subr.mxu0 0.0
    %246 = vmatpush1.msra.mxu0 %v227
    %247 = vmatprep.subr.mxu0 0.0
    %248 = vmatpush1.msra.mxu0 %v228
    %249 = vmatprep.subr.mxu0 0.0
    %250 = vmatpush1.msra.mxu0 %v229
    %251 = vmatprep.subr.mxu0 0.0
    %252 = vmatpush1.msra.mxu0 %v230
    %253 = vmatprep.subr.mxu0 0.0
    %254 = vmatpush1.msra.mxu0 %v231
    %255 = vmatprep.subr.mxu0 0.0
    %256 = vmatpush1.msra.mxu0 %v232
    %257 = vmatprep.subr.mxu0 0.0
    %258 = vmatpush1.msra.mxu0 %v233
    %259 = vmatprep.subr.mxu0 0.0
    %260 = vmatpush1.msra.mxu0 %v234
    %261 = vmatprep.subr.mxu0 0.0
    %262 = vmatpush1.msra.mxu0 %v235
    %263 = vmatprep.subr.mxu0 0.0
    %264 = vmatpush1.msra.mxu0 %v236
    %265 = vmatprep.subr.mxu0 0.0
    %266 = vmatpush1.msra.mxu0 %v237
    %267 = vmatprep.subr.mxu0 0.0
    %268 = vmatpush1.msra.mxu0 %v238
    %269 = vmatprep.subr.mxu0 0.0
    %270 = vmatpush1.msra.mxu0 %v239
    %271 = vmatprep.subr.mxu0 0.0
    %272 = vmatpush1.msra.mxu0 %v240
    %273 = vmatprep.subr.mxu0 0.0
    %274 = vmatpush1.msra.mxu0 0.0
    %275 = vmatprep.subr.mxu0 0.0
    %276 = vmatpush1.msra.mxu0 0.0
    %277 = vmatprep.subr.mxu0 0.0
    %278 = vmatpush1.msra.mxu0 0.0
    %279 = vmatprep.subr.mxu0 0.0
    %280 = vmatpush1.msra.mxu0 0.0
    %281 = vmatprep.subr.mxu0 0.0
    %282 = vmatpush1.msra.mxu0 0.0
    %283 = vmatprep.subr.mxu0 0.0
    %284 = vmatpush1.msra.mxu0 0.0
    %285 = vmatprep.subr.mxu0 0.0
    %286 = vmatpush1.msra.mxu0 0.0
    %287 = vmatprep.subr.mxu0 0.0
    %288 = vmatpush1.msra.mxu0 0.0
    %289 = vmatprep.subr.mxu0 0.0
    %290 = vmatpush1.msra.mxu0 0.0
    %291 = vmatprep.subr.mxu0 0.0
    %292 = vmatpush1.msra.mxu0 0.0
    %293 = vmatprep.subr.mxu0 0.0
    %294 = vmatpush1.msra.mxu0 0.0
    %295 = vmatprep.subr.mxu0 0.0
    %296 = vmatpush1.msra.mxu0 0.0
    %297 = vmatprep.subr.mxu0 0.0
    %298 = vmatpush1.msra.mxu0 0.0
    %299 = vmatprep.subr.mxu0 0.0
    %300 = vmatpush1.msra.mxu0 0.0
    %301 = vmatprep.subr.mxu0 0.0
    %302 = vmatpush1.msra.mxu0 0.0
    %303 = vmatprep.subr.mxu0 0.0
    %304 = vmatpush1.msra.mxu0 0.0
    %305 = vmatprep.mubr.f32.mxu0 0.0
    %306 = vmatmul.mubr.f32.gmra.mrb[0].mxu0 %v45
    %v307 = vpop.f32.mrb[0].mxu0
    %v308 = vadd.f32 0.0, %v307
    %v309 = vpop.f32.mrb[0].mxu0
    %310 = vmatprep.mubr.f32.mxu0 0.0
    %311 = vmatmul.mubr.f32.gmra.mrb[0].mxu0 %v46
    %v312 = vpop.f32.mrb[0].mxu0
    %v313 = vadd.f32 0.0, %v312
    %v314 = vpop.f32.mrb[0].mxu0
    %315 = vmatprep.mubr.f32.mxu0 0.0
    %316 = vmatmul.mubr.f32.gmra.mrb[0].mxu0 %v47
    %v317 = vpop.f32.mrb[0].mxu0
    %v318 = vadd.f32 0.0, %v317
    %v319 = vpop.f32.mrb[0].mxu0
    %320 = vmatprep.mubr.f32.mxu0 0.0
    %321 = vmatmul.mubr.f32.gmra.mrb[0].mxu0 %v48
    %v322 = vpop.f32.mrb[0].mxu0
    %v323 = vadd.f32 0.0, %v322
    %v324 = vpop.f32.mrb[0].mxu0
    %325 = vdwg.mxu0
    %vm326 = vcmask 261120
    %v328 = vsel %vm326, %v38, 0
    %v331 = vsel %vm326, %v39, 0
    %v334 = vsel %vm326, %v40, 0
    %v337 = vsel %vm326, %v41, 0
    %339 = vmatprep.subr.mxu0 0.0
    %340 = vmatpush1.msra.mxu0 %v308
    %341 = vmatprep.subr.mxu0 0.0
    %342 = vmatpush1.msra.mxu0 %v313
    %343 = vmatprep.subr.mxu0 0.0
    %344 = vmatpush1.msra.mxu0 %v318
    %345 = vmatprep.subr.mxu0 0.0
    %346 = vmatpush1.msra.mxu0 %v323
    %347 = vmatprep.subr.mxu0 0.0
    %348 = vmatpush1.msra.mxu0 0.0
    %349 = vmatprep.subr.mxu0 0.0
    %350 = vmatpush1.msra.mxu0 0.0
    %351 = vmatprep.subr.mxu0 0.0
    %352 = vmatpush1.msra.mxu0 0.0
    %353 = vmatprep.subr.mxu0 0.0
    %354 = vmatpush1.msra.mxu0 0.0
    %355 = vmatprep.subr.mxu0 0.0
    %356 = vmatpush1.msra.mxu0 0.0
    %357 = vmatprep.subr.mxu0 0.0
    %358 = vmatpush1.msra.mxu0 0.0
    %359 = vmatprep.subr.mxu0 0.0
    %360 = vmatpush1.msra.mxu0 0.0
    %361 = vmatprep.subr.mxu0 0.0
    %362 = vmatpush1.msra.mxu0 0.0
    %363 = vmatprep.subr.mxu0 0.0
    %364 = vmatpush1.msra.mxu0 0.0
    %365 = vmatprep.subr.mxu0 0.0
    %366 = vmatpush1.msra.mxu0 0.0
    %367 = vmatprep.subr.mxu0 0.0
    %368 = vmatpush1.msra.mxu0 0.0
    %369 = vmatprep.subr.mxu0 0.0
    %370 = vmatpush1.msra.mxu0 0.0
    %371 = vmatprep.subr.mxu0 0.0
    %372 = vmatpush1.msra.mxu0 0.0
    %373 = vmatprep.subr.mxu0 0.0
    %374 = vmatpush1.msra.mxu0 0.0
    %375 = vmatprep.subr.mxu0 0.0
    %376 = vmatpush1.msra.mxu0 0.0
    %377 = vmatprep.subr.mxu0 0.0
    %378 = vmatpush1.msra.mxu0 0.0
    %379 = vmatprep.subr.mxu0 0.0
    %380 = vmatpush1.msra.mxu0 0.0
    %381 = vmatprep.subr.mxu0 0.0
    %382 = vmatpush1.msra.mxu0 0.0
    %383 = vmatprep.subr.mxu0 0.0
    %384 = vmatpush1.msra.mxu0 0.0
    %385 = vmatprep.subr.mxu0 0.0
    %386 = vmatpush1.msra.mxu0 0.0
    %387 = vmatprep.subr.mxu0 0.0
    %388 = vmatpush1.msra.mxu0 0.0
    %389 = vmatprep.subr.mxu0 0.0
    %390 = vmatpush1.msra.mxu0 0.0
    %391 = vmatprep.subr.mxu0 0.0
    %392 = vmatpush1.msra.mxu0 0.0
    %393 = vmatprep.subr.mxu0 0.0
    %394 = vmatpush1.msra.mxu0 0.0
    %395 = vmatprep.subr.mxu0 0.0
    %396 = vmatpush1.msra.mxu0 0.0
    %397 = vmatprep.subr.mxu0 0.0
    %398 = vmatpush1.msra.mxu0 0.0
    %399 = vmatprep.subr.mxu0 0.0
    %400 = vmatpush1.msra.mxu0 0.0
    %401 = vmatprep.subr.mxu0 0.0
    %402 = vmatpush1.msra.mxu0 0.0
    %403 = vmatprep.mubr.f32.mxu0 0.0
    %404 = vmatmul.mubr.f32.gmra.mrb[0].mxu0 %v328
    %v405 = vpop.f32.mrb[0].mxu0
    %v406 = vadd.f32 0.0, %v405
    %v407 = vpop.f32.mrb[0].mxu0
    %408 = vmatprep.mubr.f32.mxu0 0.0
    %409 = vmatmul.mubr.f32.gmra.mrb[0].mxu0 %v331
    %v410 = vpop.f32.mrb[0].mxu0
    %v411 = vadd.f32 0.0, %v410
    %v412 = vpop.f32.mrb[0].mxu0
    %413 = vmatprep.mubr.f32.mxu0 0.0
    %414 = vmatmul.mubr.f32.gmra.mrb[0].mxu0 %v334
    %v415 = vpop.f32.mrb[0].mxu0
    %v416 = vadd.f32 0.0, %v415
    %v417 = vpop.f32.mrb[0].mxu0
    %418 = vmatprep.mubr.f32.mxu0 0.0
    %419 = vmatmul.mubr.f32.gmra.mrb[0].mxu0 %v337
    %v420 = vpop.f32.mrb[0].mxu0
    %v421 = vadd.f32 0.0, %v420
    %v422 = vpop.f32.mrb[0].mxu0
    %423 = vdwg.mxu0
    %v424 = vmax.f32 %v406, 0.0
    %v425 = vmax.f32 %v411, 0.0
    %v426 = vmax.f32 %v416, 0.0
    %v427 = vmax.f32 %v421, 0.0
    %v428 = vld [vmem:[%s8] sm:$0xff]
    %v429 = vld [vmem:[%s8 + $0x8] sm:$0xff]
    %v430 = vld [vmem:[%s8 + $0x10] sm:$0xff]
    %v431 = vld [vmem:[%s8 + $0x18] sm:$0xff]
    %v432 = vld [vmem:[%s8 + $0x20] sm:$0xff]
    %v433 = vld [vmem:[%s8 + $0x28] sm:$0xff]
    %v434 = vld [vmem:[%s8 + $0x30] sm:$0xff]
    %v435 = vld [vmem:[%s8 + $0x38] sm:$0xff]
    %v436 = vld [vmem:[%s8 + $0x40] sm:$0xff]
    %v437 = vld [vmem:[%s8 + $0x48] sm:$0xff]
    %v438 = vld [vmem:[%s8 + $0x50] sm:$0xff]
    %v439 = vld [vmem:[%s8 + $0x58] sm:$0xff]
    %v440 = vld [vmem:[%s8 + $0x60] sm:$0xff]
    %v441 = vld [vmem:[%s8 + $0x68] sm:$0xff]
    %v442 = vld [vmem:[%s8 + $0x70] sm:$0xff]
    %v443 = vld [vmem:[%s8 + $0x78] sm:$0xff]
    %444 = vmatprep.subr.mxu0 0.0
    %445 = vmatpush1.msra.mxu0 %v428
    %446 = vmatprep.subr.mxu0 0.0
    %447 = vmatpush1.msra.mxu0 %v429
    %448 = vmatprep.subr.mxu0 0.0
    %449 = vmatpush1.msra.mxu0 %v430
    %450 = vmatprep.subr.mxu0 0.0
    %451 = vmatpush1.msra.mxu0 %v431
    %452 = vmatprep.subr.mxu0 0.0
    %453 = vmatpush1.msra.mxu0 %v432
    %454 = vmatprep.subr.mxu0 0.0
    %455 = vmatpush1.msra.mxu0 %v433
    %456 = vmatprep.subr.mxu0 0.0
    %457 = vmatpush1.msra.mxu0 %v434
    %458 = vmatprep.subr.mxu0 0.0
    %459 = vmatpush1.msra.mxu0 %v435
    %460 = vmatprep.subr.mxu0 0.0
    %461 = vmatpush1.msra.mxu0 %v436
    %462 = vmatprep.subr.mxu0 0.0
    %463 = vmatpush1.msra.mxu0 %v437
    %464 = vmatprep.subr.mxu0 0.0
    %465 = vmatpush1.msra.mxu0 %v438
    %466 = vmatprep.subr.mxu0 0.0
    %467 = vmatpush1.msra.mxu0 %v439
    %468 = vmatprep.subr.mxu0 0.0
    %469 = vmatpush1.msra.mxu0 %v440
    %470 = vmatprep.subr.mxu0 0.0
    %471 = vmatpush1.msra.mxu0 %v441
    %472 = vmatprep.subr.mxu0 0.0
    %473 = vmatpush1.msra.mxu0 %v442
    %474 = vmatprep.subr.mxu0 0.0
    %475 = vmatpush1.msra.mxu0 %v443
    %476 = vmatprep.subr.mxu0 0.0
    %477 = vmatpush1.msra.mxu0 0.0
    %478 = vmatprep.subr.mxu0 0.0
    %479 = vmatpush1.msra.mxu0 0.0
    %480 = vmatprep.subr.mxu0 0.0
    %481 = vmatpush1.msra.mxu0 0.0
    %482 = vmatprep.subr.mxu0 0.0
    %483 = vmatpush1.msra.mxu0 0.0
    %484 = vmatprep.subr.mxu0 0.0
    %485 = vmatpush1.msra.mxu0 0.0
    %486 = vmatprep.subr.mxu0 0.0
    %487 = vmatpush1.msra.mxu0 0.0
    %488 = vmatprep.subr.mxu0 0.0
    %489 = vmatpush1.msra.mxu0 0.0
    %490 = vmatprep.subr.mxu0 0.0
    %491 = vmatpush1.msra.mxu0 0.0
    %492 = vmatprep.subr.mxu0 0.0
    %493 = vmatpush1.msra.mxu0 0.0
    %494 = vmatprep.subr.mxu0 0.0
    %495 = vmatpush1.msra.mxu0 0.0
    %496 = vmatprep.subr.mxu0 0.0
    %497 = vmatpush1.msra.mxu0 0.0
    %498 = vmatprep.subr.mxu0 0.0
    %499 = vmatpush1.msra.mxu0 0.0
    %500 = vmatprep.subr.mxu0 0.0
    %501 = vmatpush1.msra.mxu0 0.0
    %502 = vmatprep.subr.mxu0 0.0
    %503 = vmatpush1.msra.mxu0 0.0
    %504 = vmatprep.subr.mxu0 0.0
    %505 = vmatpush1.msra.mxu0 0.0
    %506 = vmatprep.subr.mxu0 0.0
    %507 = vmatpush1.msra.mxu0 0.0
    %508 = vmatprep.mubr.f32.mxu0 0.0
    %509 = vmatmul.mubr.f32.gmra.mrb[0].mxu0 %v49
    %v510 = vpop.f32.mrb[0].mxu0
    %v511 = vadd.f32 0.0, %v510
    %v512 = vpop.f32.mrb[0].mxu0
    %513 = vdwg.mxu0
    %vm514 = vcmask 64512
    %v516 = vsel %vm514, %v42, 0
    %518 = vmatprep.subr.mxu0 0.0
    %519 = vmatpush1.msra.mxu0 %v511
    %520 = vmatprep.subr.mxu0 0.0
    %521 = vmatpush1.msra.mxu0 0.0
    %522 = vmatprep.subr.mxu0 0.0
    %523 = vmatpush1.msra.mxu0 0.0
    %524 = vmatprep.subr.mxu0 0.0
    %525 = vmatpush1.msra.mxu0 0.0
    %526 = vmatprep.subr.mxu0 0.0
    %527 = vmatpush1.msra.mxu0 0.0
    %528 = vmatprep.subr.mxu0 0.0
    %529 = vmatpush1.msra.mxu0 0.0
    %530 = vmatprep.subr.mxu0 0.0
    %531 = vmatpush1.msra.mxu0 0.0
    %532 = vmatprep.subr.mxu0 0.0
    %533 = vmatpush1.msra.mxu0 0.0
    %534 = vmatprep.subr.mxu0 0.0
    %535 = vmatpush1.msra.mxu0 0.0
    %536 = vmatprep.subr.mxu0 0.0
    %537 = vmatpush1.msra.mxu0 0.0
    %538 = vmatprep.subr.mxu0 0.0
    %539 = vmatpush1.msra.mxu0 0.0
    %540 = vmatprep.subr.mxu0 0.0
    %541 = vmatpush1.msra.mxu0 0.0
    %542 = vmatprep.subr.mxu0 0.0
    %543 = vmatpush1.msra.mxu0 0.0
    %544 = vmatprep.subr.mxu0 0.0
    %545 = vmatpush1.msra.mxu0 0.0
    %546 = vmatprep.subr.mxu0 0.0
    %547 = vmatpush1.msra.mxu0 0.0
    %548 = vmatprep.subr.mxu0 0.0
    %549 = vmatpush1.msra.mxu0 0.0
    %550 = vmatprep.subr.mxu0 0.0
    %551 = vmatpush1.msra.mxu0 0.0
    %552 = vmatprep.subr.mxu0 0.0
    %553 = vmatpush1.msra.mxu0 0.0
    %554 = vmatprep.subr.mxu0 0.0
    %555 = vmatpush1.msra.mxu0 0.0
    %556 = vmatprep.subr.mxu0 0.0
    %557 = vmatpush1.msra.mxu0 0.0
    %558 = vmatprep.subr.mxu0 0.0
    %559 = vmatpush1.msra.mxu0 0.0
    %560 = vmatprep.subr.mxu0 0.0
    %561 = vmatpush1.msra.mxu0 0.0
    %562 = vmatprep.subr.mxu0 0.0
    %563 = vmatpush1.msra.mxu0 0.0
    %564 = vmatprep.subr.mxu0 0.0
    %565 = vmatpush1.msra.mxu0 0.0
    %566 = vmatprep.subr.mxu0 0.0
    %567 = vmatpush1.msra.mxu0 0.0
    %568 = vmatprep.subr.mxu0 0.0
    %569 = vmatpush1.msra.mxu0 0.0
    %570 = vmatprep.subr.mxu0 0.0
    %571 = vmatpush1.msra.mxu0 0.0
    %572 = vmatprep.subr.mxu0 0.0
    %573 = vmatpush1.msra.mxu0 0.0
    %574 = vmatprep.subr.mxu0 0.0
    %575 = vmatpush1.msra.mxu0 0.0
    %576 = vmatprep.subr.mxu0 0.0
    %577 = vmatpush1.msra.mxu0 0.0
    %578 = vmatprep.subr.mxu0 0.0
    %579 = vmatpush1.msra.mxu0 0.0
    %580 = vmatprep.subr.mxu0 0.0
    %581 = vmatpush1.msra.mxu0 0.0
    %582 = vmatprep.mubr.f32.mxu0 0.0
    %583 = vmatmul.mubr.f32.gmra.mrb[0].mxu0 %v516
    %v584 = vpop.f32.mrb[0].mxu0
    %v585 = vadd.f32 0.0, %v584
    %v586 = vpop.f32.mrb[0].mxu0
    %587 = vdwg.mxu0
    %v588 = vmax.f32 %v585, 0.0
    %s589 = scalar_lea.vmem %s6, 128
    %v590 = vld [vmem:[%s589] sm:$0xff]
    %v591 = vld [vmem:[%s589 + $0x8] sm:$0xff]
    %v592 = vld [vmem:[%s589 + $0x10] sm:$0xff]
    %v593 = vld [vmem:[%s589 + $0x18] sm:$0xff]
    %v594 = vld [vmem:[%s589 + $0x20] sm:$0xff]
    %v595 = vld [vmem:[%s589 + $0x28] sm:$0xff]
    %v596 = vld [vmem:[%s589 + $0x30] sm:$0xff]
    %v597 = vld [vmem:[%s589 + $0x38] sm:$0xff]
    %v598 = vld [vmem:[%s589 + $0x40] sm:$0xff]
    %v599 = vld [vmem:[%s589 + $0x48] sm:$0xff]
    %v600 = vld [vmem:[%s589 + $0x50] sm:$0xff]
    %v601 = vld [vmem:[%s589 + $0x58] sm:$0xff]
    %v602 = vld [vmem:[%s589 + $0x60] sm:$0xff]
    %v603 = vld [vmem:[%s589 + $0x68] sm:$0xff]
    %v604 = vld [vmem:[%s589 + $0x70] sm:$0xff]
    %v605 = vld [vmem:[%s589 + $0x78] sm:$0xff]
    %606 = vmatprep.subr.mxu0 0.0
    %607 = vmatpush1.msra.mxu0 %v590
    %608 = vmatprep.subr.mxu0 0.0
    %609 = vmatpush1.msra.mxu0 %v591
    %610 = vmatprep.subr.mxu0 0.0
    %611 = vmatpush1.msra.mxu0 %v592
    %612 = vmatprep.subr.mxu0 0.0
    %613 = vmatpush1.msra.mxu0 %v593
    %614 = vmatprep.subr.mxu0 0.0
    %615 = vmatpush1.msra.mxu0 %v594
    %616 = vmatprep.subr.mxu0 0.0
    %617 = vmatpush1.msra.mxu0 %v595
    %618 = vmatprep.subr.mxu0 0.0
    %619 = vmatpush1.msra.mxu0 %v596
    %620 = vmatprep.subr.mxu0 0.0
    %621 = vmatpush1.msra.mxu0 %v597
    %622 = vmatprep.subr.mxu0 0.0
    %623 = vmatpush1.msra.mxu0 %v598
    %624 = vmatprep.subr.mxu0 0.0
    %625 = vmatpush1.msra.mxu0 %v599
    %626 = vmatprep.subr.mxu0 0.0
    %627 = vmatpush1.msra.mxu0 %v600
    %628 = vmatprep.subr.mxu0 0.0
    %629 = vmatpush1.msra.mxu0 %v601
    %630 = vmatprep.subr.mxu0 0.0
    %631 = vmatpush1.msra.mxu0 %v602
    %632 = vmatprep.subr.mxu0 0.0
    %633 = vmatpush1.msra.mxu0 %v603
    %634 = vmatprep.subr.mxu0 0.0
    %635 = vmatpush1.msra.mxu0 %v604
    %636 = vmatprep.subr.mxu0 0.0
    %637 = vmatpush1.msra.mxu0 %v605
    %638 = vmatprep.subr.mxu0 0.0
    %639 = vmatpush1.msra.mxu0 0.0
    %640 = vmatprep.subr.mxu0 0.0
    %641 = vmatpush1.msra.mxu0 0.0
    %642 = vmatprep.subr.mxu0 0.0
    %643 = vmatpush1.msra.mxu0 0.0
    %644 = vmatprep.subr.mxu0 0.0
    %645 = vmatpush1.msra.mxu0 0.0
    %646 = vmatprep.subr.mxu0 0.0
    %647 = vmatpush1.msra.mxu0 0.0
    %648 = vmatprep.subr.mxu0 0.0
    %649 = vmatpush1.msra.mxu0 0.0
    %650 = vmatprep.subr.mxu0 0.0
    %651 = vmatpush1.msra.mxu0 0.0
    %652 = vmatprep.subr.mxu0 0.0
    %653 = vmatpush1.msra.mxu0 0.0
    %654 = vmatprep.subr.mxu0 0.0
    %655 = vmatpush1.msra.mxu0 0.0
    %656 = vmatprep.subr.mxu0 0.0
    %657 = vmatpush1.msra.mxu0 0.0
    %658 = vmatprep.subr.mxu0 0.0
    %659 = vmatpush1.msra.mxu0 0.0
    %660 = vmatprep.subr.mxu0 0.0
    %661 = vmatpush1.msra.mxu0 0.0
    %662 = vmatprep.subr.mxu0 0.0
    %663 = vmatpush1.msra.mxu0 0.0
    %664 = vmatprep.subr.mxu0 0.0
    %665 = vmatpush1.msra.mxu0 0.0
    %666 = vmatprep.subr.mxu0 0.0
    %667 = vmatpush1.msra.mxu0 0.0
    %668 = vmatprep.subr.mxu0 0.0
    %669 = vmatpush1.msra.mxu0 0.0
    %670 = vmatprep.mubr.f32.mxu0 0.0
    %671 = vmatmul.mubr.f32.gmra.mrb[0].mxu0 %v223
    %v672 = vpop.f32.mrb[0].mxu0
    %v673 = vadd.f32 0.0, %v672
    %v674 = vpop.f32.mrb[0].mxu0
    %675 = vmatprep.mubr.f32.mxu0 0.0
    %676 = vmatmul.mubr.f32.gmra.mrb[0].mxu0 %v224
    %v677 = vpop.f32.mrb[0].mxu0
    %v678 = vadd.f32 0.0, %v677
    %v679 = vpop.f32.mrb[0].mxu0
    %680 = vdwg.mxu0
    %681 = vmatprep.subr.mxu0 0.0
    %682 = vmatpush1.msra.mxu0 %v673
    %683 = vmatprep.subr.mxu0 0.0
    %684 = vmatpush1.msra.mxu0 %v678
    %685 = vmatprep.subr.mxu0 0.0
    %686 = vmatpush1.msra.mxu0 0.0
    %687 = vmatprep.subr.mxu0 0.0
    %688 = vmatpush1.msra.mxu0 0.0
    %689 = vmatprep.subr.mxu0 0.0
    %690 = vmatpush1.msra.mxu0 0.0
    %691 = vmatprep.subr.mxu0 0.0
    %692 = vmatpush1.msra.mxu0 0.0
    %693 = vmatprep.subr.mxu0 0.0
    %694 = vmatpush1.msra.mxu0 0.0
    %695 = vmatprep.subr.mxu0 0.0
    %696 = vmatpush1.msra.mxu0 0.0
    %697 = vmatprep.subr.mxu0 0.0
    %698 = vmatpush1.msra.mxu0 0.0
    %699 = vmatprep.subr.mxu0 0.0
    %700 = vmatpush1.msra.mxu0 0.0
    %701 = vmatprep.subr.mxu0 0.0
    %702 = vmatpush1.msra.mxu0 0.0
    %703 = vmatprep.subr.mxu0 0.0
    %704 = vmatpush1.msra.mxu0 0.0
    %705 = vmatprep.subr.mxu0 0.0
    %706 = vmatpush1.msra.mxu0 0.0
    %707 = vmatprep.subr.mxu0 0.0
    %708 = vmatpush1.msra.mxu0 0.0
    %709 = vmatprep.subr.mxu0 0.0
    %710 = vmatpush1.msra.mxu0 0.0
    %711 = vmatprep.subr.mxu0 0.0
    %712 = vmatpush1.msra.mxu0 0.0
    %713 = vmatprep.subr.mxu0 0.0
    %714 = vmatpush1.msra.mxu0 0.0
    %715 = vmatprep.subr.mxu0 0.0
    %716 = vmatpush1.msra.mxu0 0.0
    %717 = vmatprep.subr.mxu0 0.0
    %718 = vmatpush1.msra.mxu0 0.0
    %719 = vmatprep.subr.mxu0 0.0
    %720 = vmatpush1.msra.mxu0 0.0
    %721 = vmatprep.subr.mxu0 0.0
    %722 = vmatpush1.msra.mxu0 0.0
    %723 = vmatprep.subr.mxu0 0.0
    %724 = vmatpush1.msra.mxu0 0.0
    %725 = vmatprep.subr.mxu0 0.0
    %726 = vmatpush1.msra.mxu0 0.0
    %727 = vmatprep.subr.mxu0 0.0
    %728 = vmatpush1.msra.mxu0 0.0
    %729 = vmatprep.subr.mxu0 0.0
    %730 = vmatpush1.msra.mxu0 0.0
    %731 = vmatprep.subr.mxu0 0.0
    %732 = vmatpush1.msra.mxu0 0.0
    %733 = vmatprep.subr.mxu0 0.0
    %734 = vmatpush1.msra.mxu0 0.0
    %735 = vmatprep.subr.mxu0 0.0
    %736 = vmatpush1.msra.mxu0 0.0
    %737 = vmatprep.subr.mxu0 0.0
    %738 = vmatpush1.msra.mxu0 0.0
    %739 = vmatprep.subr.mxu0 0.0
    %740 = vmatpush1.msra.mxu0 0.0
    %741 = vmatprep.subr.mxu0 0.0
    %742 = vmatpush1.msra.mxu0 0.0
    %743 = vmatprep.subr.mxu0 0.0
    %744 = vmatpush1.msra.mxu0 0.0
    %745 = vmatprep.mubr.f32.mxu0 0.0
    %746 = vmatmul.mubr.f32.gmra.mrb[0].mxu0 %v143
    %v747 = vpop.f32.mrb[0].mxu0
    %v748 = vadd.f32 0.0, %v747
    %v749 = vpop.f32.mrb[0].mxu0
    %750 = vmatprep.mubr.f32.mxu0 0.0
    %751 = vmatmul.mubr.f32.gmra.mrb[0].mxu0 %v146
    %v752 = vpop.f32.mrb[0].mxu0
    %v753 = vadd.f32 0.0, %v752
    %v754 = vpop.f32.mrb[0].mxu0
    %755 = vdwg.mxu0
    %v756 = vmax.f32 %v748, 0.0
    %v757 = vmax.f32 %v753, 0.0
    %s758 = scalar_lea.vmem %s7, 128
    %v759 = vld [vmem:[%s758] sm:$0xff]
    %v760 = vld [vmem:[%s758 + $0x8] sm:$0xff]
    %v761 = vld [vmem:[%s758 + $0x10] sm:$0xff]
    %v762 = vld [vmem:[%s758 + $0x18] sm:$0xff]
    %v763 = vld [vmem:[%s758 + $0x20] sm:$0xff]
    %v764 = vld [vmem:[%s758 + $0x28] sm:$0xff]
    %v765 = vld [vmem:[%s758 + $0x30] sm:$0xff]
    %v766 = vld [vmem:[%s758 + $0x38] sm:$0xff]
    %v767 = vld [vmem:[%s758 + $0x40] sm:$0xff]
    %v768 = vld [vmem:[%s758 + $0x48] sm:$0xff]
    %v769 = vld [vmem:[%s758 + $0x50] sm:$0xff]
    %v770 = vld [vmem:[%s758 + $0x58] sm:$0xff]
    %v771 = vld [vmem:[%s758 + $0x60] sm:$0xff]
    %v772 = vld [vmem:[%s758 + $0x68] sm:$0xff]
    %v773 = vld [vmem:[%s758 + $0x70] sm:$0xff]
    %v774 = vld [vmem:[%s758 + $0x78] sm:$0xff]
    %775 = vmatprep.subr.mxu0 0.0
    %776 = vmatpush1.msra.mxu0 %v759
    %777 = vmatprep.subr.mxu0 0.0
    %778 = vmatpush1.msra.mxu0 %v760
    %779 = vmatprep.subr.mxu0 0.0
    %780 = vmatpush1.msra.mxu0 %v761
    %781 = vmatprep.subr.mxu0 0.0
    %782 = vmatpush1.msra.mxu0 %v762
    %783 = vmatprep.subr.mxu0 0.0
    %784 = vmatpush1.msra.mxu0 %v763
    %785 = vmatprep.subr.mxu0 0.0
    %786 = vmatpush1.msra.mxu0 %v764
    %787 = vmatprep.subr.mxu0 0.0
    %788 = vmatpush1.msra.mxu0 %v765
    %789 = vmatprep.subr.mxu0 0.0
    %790 = vmatpush1.msra.mxu0 %v766
    %791 = vmatprep.subr.mxu0 0.0
    %792 = vmatpush1.msra.mxu0 %v767
    %793 = vmatprep.subr.mxu0 0.0
    %794 = vmatpush1.msra.mxu0 %v768
    %795 = vmatprep.subr.mxu0 0.0
    %796 = vmatpush1.msra.mxu0 %v769
    %797 = vmatprep.subr.mxu0 0.0
    %798 = vmatpush1.msra.mxu0 %v770
    %799 = vmatprep.subr.mxu0 0.0
    %800 = vmatpush1.msra.mxu0 %v771
    %801 = vmatprep.subr.mxu0 0.0
    %802 = vmatpush1.msra.mxu0 %v772
    %803 = vmatprep.subr.mxu0 0.0
    %804 = vmatpush1.msra.mxu0 %v773
    %805 = vmatprep.subr.mxu0 0.0
    %806 = vmatpush1.msra.mxu0 %v774
    %807 = vmatprep.subr.mxu0 0.0
    %808 = vmatpush1.msra.mxu0 0.0
    %809 = vmatprep.subr.mxu0 0.0
    %810 = vmatpush1.msra.mxu0 0.0
    %811 = vmatprep.subr.mxu0 0.0
    %812 = vmatpush1.msra.mxu0 0.0
    %813 = vmatprep.subr.mxu0 0.0
    %814 = vmatpush1.msra.mxu0 0.0
    %815 = vmatprep.subr.mxu0 0.0
    %816 = vmatpush1.msra.mxu0 0.0
    %817 = vmatprep.subr.mxu0 0.0
    %818 = vmatpush1.msra.mxu0 0.0
    %819 = vmatprep.subr.mxu0 0.0
    %820 = vmatpush1.msra.mxu0 0.0
    %821 = vmatprep.subr.mxu0 0.0
    %822 = vmatpush1.msra.mxu0 0.0
    %823 = vmatprep.subr.mxu0 0.0
    %824 = vmatpush1.msra.mxu0 0.0
    %825 = vmatprep.subr.mxu0 0.0
    %826 = vmatpush1.msra.mxu0 0.0
    %827 = vmatprep.subr.mxu0 0.0
    %828 = vmatpush1.msra.mxu0 0.0
    %829 = vmatprep.subr.mxu0 0.0
    %830 = vmatpush1.msra.mxu0 0.0
    %831 = vmatprep.subr.mxu0 0.0
    %832 = vmatpush1.msra.mxu0 0.0
    %833 = vmatprep.subr.mxu0 0.0
    %834 = vmatpush1.msra.mxu0 0.0
    %835 = vmatprep.subr.mxu0 0.0
    %836 = vmatpush1.msra.mxu0 0.0
    %837 = vmatprep.subr.mxu0 0.0
    %838 = vmatpush1.msra.mxu0 0.0
    %839 = vmatprep.mubr.f32.mxu0 0.0
    %840 = vmatmul.mubr.f32.gmra.mrb[0].mxu0 %v424
    %v841 = vpop.f32.mrb[0].mxu0
    %v842 = vadd.f32 0.0, %v841
    %v843 = vpop.f32.mrb[0].mxu0
    %844 = vmatprep.mubr.f32.mxu0 0.0
    %845 = vmatmul.mubr.f32.gmra.mrb[0].mxu0 %v425
    %v846 = vpop.f32.mrb[0].mxu0
    %v847 = vadd.f32 0.0, %v846
    %v848 = vpop.f32.mrb[0].mxu0
    %849 = vmatprep.mubr.f32.mxu0 0.0
    %850 = vmatmul.mubr.f32.gmra.mrb[0].mxu0 %v426
    %v851 = vpop.f32.mrb[0].mxu0
    %v852 = vadd.f32 0.0, %v851
    %v853 = vpop.f32.mrb[0].mxu0
    %854 = vmatprep.mubr.f32.mxu0 0.0
    %855 = vmatmul.mubr.f32.gmra.mrb[0].mxu0 %v427
    %v856 = vpop.f32.mrb[0].mxu0
    %v857 = vadd.f32 0.0, %v856
    %v858 = vpop.f32.mrb[0].mxu0
    %859 = vdwg.mxu0
    %860 = vmatprep.subr.mxu0 0.0
    %861 = vmatpush1.msra.mxu0 %v842
    %862 = vmatprep.subr.mxu0 0.0
    %863 = vmatpush1.msra.mxu0 %v847
    %864 = vmatprep.subr.mxu0 0.0
    %865 = vmatpush1.msra.mxu0 %v852
    %866 = vmatprep.subr.mxu0 0.0
    %867 = vmatpush1.msra.mxu0 %v857
    %868 = vmatprep.subr.mxu0 0.0
    %869 = vmatpush1.msra.mxu0 0.0
    %870 = vmatprep.subr.mxu0 0.0
    %871 = vmatpush1.msra.mxu0 0.0
    %872 = vmatprep.subr.mxu0 0.0
    %873 = vmatpush1.msra.mxu0 0.0
    %874 = vmatprep.subr.mxu0 0.0
    %875 = vmatpush1.msra.mxu0 0.0
    %876 = vmatprep.subr.mxu0 0.0
    %877 = vmatpush1.msra.mxu0 0.0
    %878 = vmatprep.subr.mxu0 0.0
    %879 = vmatpush1.msra.mxu0 0.0
    %880 = vmatprep.subr.mxu0 0.0
    %881 = vmatpush1.msra.mxu0 0.0
    %882 = vmatprep.subr.mxu0 0.0
    %883 = vmatpush1.msra.mxu0 0.0
    %884 = vmatprep.subr.mxu0 0.0
    %885 = vmatpush1.msra.mxu0 0.0
    %886 = vmatprep.subr.mxu0 0.0
    %887 = vmatpush1.msra.mxu0 0.0
    %888 = vmatprep.subr.mxu0 0.0
    %889 = vmatpush1.msra.mxu0 0.0
    %890 = vmatprep.subr.mxu0 0.0
    %891 = vmatpush1.msra.mxu0 0.0
    %892 = vmatprep.subr.mxu0 0.0
    %893 = vmatpush1.msra.mxu0 0.0
    %894 = vmatprep.subr.mxu0 0.0
    %895 = vmatpush1.msra.mxu0 0.0
    %896 = vmatprep.subr.mxu0 0.0
    %897 = vmatpush1.msra.mxu0 0.0
    %898 = vmatprep.subr.mxu0 0.0
    %899 = vmatpush1.msra.mxu0 0.0
    %900 = vmatprep.subr.mxu0 0.0
    %901 = vmatpush1.msra.mxu0 0.0
    %902 = vmatprep.subr.mxu0 0.0
    %903 = vmatpush1.msra.mxu0 0.0
    %904 = vmatprep.subr.mxu0 0.0
    %905 = vmatpush1.msra.mxu0 0.0
    %906 = vmatprep.subr.mxu0 0.0
    %907 = vmatpush1.msra.mxu0 0.0
    %908 = vmatprep.subr.mxu0 0.0
    %909 = vmatpush1.msra.mxu0 0.0
    %910 = vmatprep.subr.mxu0 0.0
    %911 = vmatpush1.msra.mxu0 0.0
    %912 = vmatprep.subr.mxu0 0.0
    %913 = vmatpush1.msra.mxu0 0.0
    %914 = vmatprep.subr.mxu0 0.0
    %915 = vmatpush1.msra.mxu0 0.0
    %916 = vmatprep.subr.mxu0 0.0
    %917 = vmatpush1.msra.mxu0 0.0
    %918 = vmatprep.subr.mxu0 0.0
    %919 = vmatpush1.msra.mxu0 0.0
    %920 = vmatprep.subr.mxu0 0.0
    %921 = vmatpush1.msra.mxu0 0.0
    %922 = vmatprep.subr.mxu0 0.0
    %923 = vmatpush1.msra.mxu0 0.0
    %924 = vmatprep.mubr.f32.mxu0 0.0
    %925 = vmatmul.mubr.f32.gmra.mrb[0].mxu0 %v328
    %v926 = vpop.f32.mrb[0].mxu0
    %v927 = vadd.f32 0.0, %v926
    %v928 = vpop.f32.mrb[0].mxu0
    %929 = vmatprep.mubr.f32.mxu0 0.0
    %930 = vmatmul.mubr.f32.gmra.mrb[0].mxu0 %v331
    %v931 = vpop.f32.mrb[0].mxu0
    %v932 = vadd.f32 0.0, %v931
    %v933 = vpop.f32.mrb[0].mxu0
    %934 = vmatprep.mubr.f32.mxu0 0.0
    %935 = vmatmul.mubr.f32.gmra.mrb[0].mxu0 %v334
    %v936 = vpop.f32.mrb[0].mxu0
    %v937 = vadd.f32 0.0, %v936
    %v938 = vpop.f32.mrb[0].mxu0
    %939 = vmatprep.mubr.f32.mxu0 0.0
    %940 = vmatmul.mubr.f32.gmra.mrb[0].mxu0 %v337
    %v941 = vpop.f32.mrb[0].mxu0
    %v942 = vadd.f32 0.0, %v941
    %v943 = vpop.f32.mrb[0].mxu0
    %944 = vdwg.mxu0
    %v945 = vmax.f32 %v927, 0.0
    %v946 = vmax.f32 %v932, 0.0
    %v947 = vmax.f32 %v937, 0.0
    %v948 = vmax.f32 %v942, 0.0
    %s949 = scalar_lea.vmem %s8, 128
    %v950 = vld [vmem:[%s949] sm:$0xff]
    %v951 = vld [vmem:[%s949 + $0x8] sm:$0xff]
    %v952 = vld [vmem:[%s949 + $0x10] sm:$0xff]
    %v953 = vld [vmem:[%s949 + $0x18] sm:$0xff]
    %v954 = vld [vmem:[%s949 + $0x20] sm:$0xff]
    %v955 = vld [vmem:[%s949 + $0x28] sm:$0xff]
    %v956 = vld [vmem:[%s949 + $0x30] sm:$0xff]
    %v957 = vld [vmem:[%s949 + $0x38] sm:$0xff]
    %v958 = vld [vmem:[%s949 + $0x40] sm:$0xff]
    %v959 = vld [vmem:[%s949 + $0x48] sm:$0xff]
    %v960 = vld [vmem:[%s949 + $0x50] sm:$0xff]
    %v961 = vld [vmem:[%s949 + $0x58] sm:$0xff]
    %v962 = vld [vmem:[%s949 + $0x60] sm:$0xff]
    %v963 = vld [vmem:[%s949 + $0x68] sm:$0xff]
    %v964 = vld [vmem:[%s949 + $0x70] sm:$0xff]
    %v965 = vld [vmem:[%s949 + $0x78] sm:$0xff]
    %966 = vmatprep.subr.mxu0 0.0
    %967 = vmatpush1.msra.mxu0 %v950
    %968 = vmatprep.subr.mxu0 0.0
    %969 = vmatpush1.msra.mxu0 %v951
    %970 = vmatprep.subr.mxu0 0.0
    %971 = vmatpush1.msra.mxu0 %v952
    %972 = vmatprep.subr.mxu0 0.0
    %973 = vmatpush1.msra.mxu0 %v953
    %974 = vmatprep.subr.mxu0 0.0
    %975 = vmatpush1.msra.mxu0 %v954
    %976 = vmatprep.subr.mxu0 0.0
    %977 = vmatpush1.msra.mxu0 %v955
    %978 = vmatprep.subr.mxu0 0.0
    %979 = vmatpush1.msra.mxu0 %v956
    %980 = vmatprep.subr.mxu0 0.0
    %981 = vmatpush1.msra.mxu0 %v957
    %982 = vmatprep.subr.mxu0 0.0
    %983 = vmatpush1.msra.mxu0 %v958
    %984 = vmatprep.subr.mxu0 0.0
    %985 = vmatpush1.msra.mxu0 %v959
    %986 = vmatprep.subr.mxu0 0.0
    %987 = vmatpush1.msra.mxu0 %v960
    %988 = vmatprep.subr.mxu0 0.0
    %989 = vmatpush1.msra.mxu0 %v961
    %990 = vmatprep.subr.mxu0 0.0
    %991 = vmatpush1.msra.mxu0 %v962
    %992 = vmatprep.subr.mxu0 0.0
    %993 = vmatpush1.msra.mxu0 %v963
    %994 = vmatprep.subr.mxu0 0.0
    %995 = vmatpush1.msra.mxu0 %v964
    %996 = vmatprep.subr.mxu0 0.0
    %997 = vmatpush1.msra.mxu0 %v965
    %998 = vmatprep.subr.mxu0 0.0
    %999 = vmatpush1.msra.mxu0 0.0
    %1000 = vmatprep.subr.mxu0 0.0
    %1001 = vmatpush1.msra.mxu0 0.0
    %1002 = vmatprep.subr.mxu0 0.0
    %1003 = vmatpush1.msra.mxu0 0.0
    %1004 = vmatprep.subr.mxu0 0.0
    %1005 = vmatpush1.msra.mxu0 0.0
    %1006 = vmatprep.subr.mxu0 0.0
    %1007 = vmatpush1.msra.mxu0 0.0
    %1008 = vmatprep.subr.mxu0 0.0
    %1009 = vmatpush1.msra.mxu0 0.0
    %1010 = vmatprep.subr.mxu0 0.0
    %1011 = vmatpush1.msra.mxu0 0.0
    %1012 = vmatprep.subr.mxu0 0.0
    %1013 = vmatpush1.msra.mxu0 0.0
    %1014 = vmatprep.subr.mxu0 0.0
    %1015 = vmatpush1.msra.mxu0 0.0
    %1016 = vmatprep.subr.mxu0 0.0
    %1017 = vmatpush1.msra.mxu0 0.0
    %1018 = vmatprep.subr.mxu0 0.0
    %1019 = vmatpush1.msra.mxu0 0.0
    %1020 = vmatprep.subr.mxu0 0.0
    %1021 = vmatpush1.msra.mxu0 0.0
    %1022 = vmatprep.subr.mxu0 0.0
    %1023 = vmatpush1.msra.mxu0 0.0
    %1024 = vmatprep.subr.mxu0 0.0
    %1025 = vmatpush1.msra.mxu0 0.0
    %1026 = vmatprep.subr.mxu0 0.0
    %1027 = vmatpush1.msra.mxu0 0.0
    %1028 = vmatprep.subr.mxu0 0.0
    %1029 = vmatpush1.msra.mxu0 0.0
    %1030 = vmatprep.mubr.f32.mxu0 0.0
    %1031 = vmatmul.mubr.f32.gmra.mrb[0].mxu0 %v588
    %v1032 = vpop.f32.mrb[0].mxu0
    %v1033 = vadd.f32 0.0, %v1032
    %v1034 = vpop.f32.mrb[0].mxu0
    %1035 = vdwg.mxu0
    %1036 = vmatprep.subr.mxu0 0.0
    %1037 = vmatpush1.msra.mxu0 %v1033
    %1038 = vmatprep.subr.mxu0 0.0
    %1039 = vmatpush1.msra.mxu0 0.0
    %1040 = vmatprep.subr.mxu0 0.0
    %1041 = vmatpush1.msra.mxu0 0.0
    %1042 = vmatprep.subr.mxu0 0.0
    %1043 = vmatpush1.msra.mxu0 0.0
    %1044 = vmatprep.subr.mxu0 0.0
    %1045 = vmatpush1.msra.mxu0 0.0
    %1046 = vmatprep.subr.mxu0 0.0
    %1047 = vmatpush1.msra.mxu0 0.0
    %1048 = vmatprep.subr.mxu0 0.0
    %1049 = vmatpush1.msra.mxu0 0.0
    %1050 = vmatprep.subr.mxu0 0.0
    %1051 = vmatpush1.msra.mxu0 0.0
    %1052 = vmatprep.subr.mxu0 0.0
    %1053 = vmatpush1.msra.mxu0 0.0
    %1054 = vmatprep.subr.mxu0 0.0
    %1055 = vmatpush1.msra.mxu0 0.0
    %1056 = vmatprep.subr.mxu0 0.0
    %1057 = vmatpush1.msra.mxu0 0.0
    %1058 = vmatprep.subr.mxu0 0.0
    %1059 = vmatpush1.msra.mxu0 0.0
    %1060 = vmatprep.subr.mxu0 0.0
    %1061 = vmatpush1.msra.mxu0 0.0
    %1062 = vmatprep.subr.mxu0 0.0
    %1063 = vmatpush1.msra.mxu0 0.0
    %1064 = vmatprep.subr.mxu0 0.0
    %1065 = vmatpush1.msra.mxu0 0.0
    %1066 = vmatprep.subr.mxu0 0.0
    %1067 = vmatpush1.msra.mxu0 0.0
    %1068 = vmatprep.subr.mxu0 0.0
    %1069 = vmatpush1.msra.mxu0 0.0
    %1070 = vmatprep.subr.mxu0 0.0
    %1071 = vmatpush1.msra.mxu0 0.0
    %1072 = vmatprep.subr.mxu0 0.0
    %1073 = vmatpush1.msra.mxu0 0.0
    %1074 = vmatprep.subr.mxu0 0.0
    %1075 = vmatpush1.msra.mxu0 0.0
    %1076 = vmatprep.subr.mxu0 0.0
    %1077 = vmatpush1.msra.mxu0 0.0
    %1078 = vmatprep.subr.mxu0 0.0
    %1079 = vmatpush1.msra.mxu0 0.0
    %1080 = vmatprep.subr.mxu0 0.0
    %1081 = vmatpush1.msra.mxu0 0.0
    %1082 = vmatprep.subr.mxu0 0.0
    %1083 = vmatpush1.msra.mxu0 0.0
    %1084 = vmatprep.subr.mxu0 0.0
    %1085 = vmatpush1.msra.mxu0 0.0
    %1086 = vmatprep.subr.mxu0 0.0
    %1087 = vmatpush1.msra.mxu0 0.0
    %1088 = vmatprep.subr.mxu0 0.0
    %1089 = vmatpush1.msra.mxu0 0.0
    %1090 = vmatprep.subr.mxu0 0.0
    %1091 = vmatpush1.msra.mxu0 0.0
    %1092 = vmatprep.subr.mxu0 0.0
    %1093 = vmatpush1.msra.mxu0 0.0
    %1094 = vmatprep.subr.mxu0 0.0
    %1095 = vmatpush1.msra.mxu0 0.0
    %1096 = vmatprep.subr.mxu0 0.0
    %1097 = vmatpush1.msra.mxu0 0.0
    %1098 = vmatprep.subr.mxu0 0.0
    %1099 = vmatpush1.msra.mxu0 0.0
    %1100 = vmatprep.mubr.f32.mxu0 0.0
    %1101 = vmatmul.mubr.f32.gmra.mrb[0].mxu0 %v516
    %v1102 = vpop.f32.mrb[0].mxu0
    %v1103 = vadd.f32 0.0, %v1102
    %v1104 = vpop.f32.mrb[0].mxu0
    %1105 = vdwg.mxu0
    %v1106 = vmax.f32 %v1103, 0.0
    %1107 = vst [vmem:[%s9] sm:$0xff] %v756
    %1108 = vst [vmem:[%s9 + $0x8] sm:$0xff] %v757
    %1109 = vst [vmem:[%s10] sm:$0xff] %v945
    %1110 = vst [vmem:[%s10 + $0x8] sm:$0xff] %v946
    %1111 = vst [vmem:[%s10 + $0x10] sm:$0xff] %v947
    %1112 = vst [vmem:[%s10 + $0x18] sm:$0xff] %v948
    %1113 = vst [vmem:[#allocation2] sm:$0xff] %v1106
    // Predicated region
    $region38: #{scn2_forward.1} parent=1 // pred_check
      _
    $region39: #{scn2_forward.1} parent=1 // pred_check_branch
      %1115 = sbr.rel (0) target = $region41
    $region40: #{scn2_forward.1} parent=1 // pred_region
      _
    $region41: #{scn2_forward.1} parent=1 // pred_fallthru
      _
    // Predicated region
    $region42: #{scn2_forward.1} parent=1 // pred_check
      _
    $region43: #{scn2_forward.1} parent=1 // pred_check_branch
      %1117 = sbr.rel (0) target = $region45
    $region44: #{scn2_forward.1} parent=1 // pred_region
      _
    $region45: #{scn2_forward.1} parent=1 // pred_fallthru
      _
    // Predicated region
    $region46: #{scn2_forward.1} parent=1 // pred_check
      _
    $region47: #{scn2_forward.1} parent=1 // pred_check_branch
      %1119 = sbr.rel (0) target = $region49
    $region48: #{scn2_forward.1} parent=1 // pred_region
      %s1121 = ssub.s32 128, 128
      %1122 = vsyncadd [#allocation3], %s1121
      %s1124 = sshll.u32 [#allocation2], 4
      %s1125 = int_to_ptr.vmem [resolvable:$true] %s1124
      %1127 = dma.vmem_to_hbm [thread:$0]  %s1125, 128, %s11, [#allocation3]
    $region49: #{scn2_forward.1} parent=1 // pred_fallthru
      _
    // Predicated region
    $region50: #{scn2_forward.1} parent=1 // pred_check
      _
    $region51: #{scn2_forward.1} parent=1 // pred_check_branch
      %1129 = sbr.rel (0) target = $region53
    $region52: #{scn2_forward.1} parent=1 // pred_region
      _
    $region53: #{scn2_forward.1} parent=1 // pred_fallthru
      _
    // Predicated region
    $region54: #{scn2_forward.1} parent=1 // pred_check
      _
    $region55: #{scn2_forward.1} parent=1 // pred_check_branch
      %1131 = sbr.rel (0) target = $region57
    $region56: #{scn2_forward.1} parent=1 // pred_region
      _
    $region57: #{scn2_forward.1} parent=1 // pred_fallthru
      _
    // Predicated region
    $region58: #{scn2_forward.1} parent=1 // pred_check
      _
    $region59: #{scn2_forward.1} parent=1 // pred_check_branch
      %1133 = sbr.rel (0) target = $region61
    $region60: #{scn2_forward.1} parent=1 // pred_region
      %1134 = dma.done [#allocation3], 128
    $region61: #{scn2_forward.1} parent=1 // pred_fallthru
      _
    %1135 = vsyncpa [#allocation3], 1

</llo_original>
